<compile_context>
chip_gen: v7x
topology: tpu7x:2x2x1
jax: 0.10.0
libtpu: 0.0.40
codegen_flags: <defaults>
</compile_context>

<pallas_src>
import math
from functools import partial

import numpy as np
import jax
import jax.numpy as jnp
from jax.experimental import pallas as pl
from jax.experimental.pallas import tpu as pltpu


def _round_up(a, b):
    return ((a + b - 1) // b) * b


def _fern_kernel(x_ref, w_ref, o_ref, votes_ref, *, K, M, P, D_out):
    """x_ref: (M*K, Lt) input bits; w_ref: (D_out, M*2^K) bf16 table;
    o_ref: (D_out, Lt) f32 output; votes_ref: (M*2^K, Lt) f32 scratch."""
    LP = int(round(math.log2(P)))
    nwords = 1 << K
    full_mask = nwords - 1
    Lt = x_ref.shape[1]

    # Hoisted iotas / constants (reused by every fern).
    word_iota = jax.lax.broadcasted_iota(jnp.int32, (nwords, Lt), 0)   # (2^K, Lt)
    k_iota = jax.lax.broadcasted_iota(jnp.int32, (K, Lt), 0)           # (K,  Lt)
    k_col = jax.lax.broadcasted_iota(jnp.int32, (K, 1), 0)
    pow2 = jnp.left_shift(jnp.int32(1), (K - 1) - k_col)               # (K, 1)
    # Candidate bit pattern: bit j of candidate p == (p >> j) & 1 (matches the
    # torch zeros/ones-repeat pattern).  (P, 1) bool columns, broadcast below.
    p_col = jax.lax.broadcasted_iota(jnp.int32, (P, 1), 0)
    bitpat = [(jnp.right_shift(p_col, j) & 1) == 1 for j in range(LP)]

    for m in range(M):                                   # ferns: small static loop
        T = x_ref[m * K:(m + 1) * K, :].astype(jnp.float32)            # (K, Lt)

        # (1) most probable word -- vectorized bit pack + one sublane reduce
        TB = jnp.round(T).astype(jnp.int32)
        WB = jnp.sum(TB * pow2, axis=0, keepdims=True)                 # (1, Lt)

        # (2)+(3) pick LP most ambiguous bits and update the STACKED (P, Lt)
        # candidate words / activations in the same loop (per-j intermediates
        # are consumed immediately -> tiny live set).
        BA = jnp.abs(T - 0.5)
        words = jnp.broadcast_to(WB, (P, Lt))                          # (P, Lt) i32
        acts = jnp.ones((P, Lt), jnp.float32)                          # (P, Lt) f32
        for j in range(LP):
            mn = jnp.min(BA, axis=0, keepdims=True)                    # XLU reduce
            a_j = jnp.min(jnp.where(BA == mn, k_iota, K),
                          axis=0, keepdims=True)                       # first argmin
            sel = (k_iota == a_j)                                      # (K, Lt)
            v_j = jnp.sum(jnp.where(sel, T, 0.0), axis=0, keepdims=True)
            BA = BA + sel.astype(jnp.float32)            # exclude this bit next round
            # mask directly from the index -- no sublane reduction needed
            mask = jnp.left_shift(jnp.int32(1), (K - 1) - a_j)         # (1, Lt)
            on_w = jnp.bitwise_or(words, mask)
            off_w = jnp.bitwise_and(words, jnp.bitwise_xor(mask, full_mask))
            words = jnp.where(bitpat[j], on_w, off_w)                  # (P, Lt)
            acts = acts * jnp.where(bitpat[j], v_j, 1.0 - v_j)         # (P, Lt)

        # (4) dense per-tile vote rows == coalesced sparse-COO rows, written
        # straight into the shared scratch block (no concatenate copy).
        votes = jnp.zeros((nwords, Lt), jnp.float32)
        for p in range(P):
            votes = votes + jnp.where(word_iota == words[p:p + 1, :],
                                      acts[p:p + 1, :], 0.0)
        votes_ref[m * nwords:(m + 1) * nwords, :] = votes

    # (5) single fused MXU matmul over all ferns; bf16 operands, f32 accumulate.
    o_ref[...] = jnp.dot(w_ref[...], votes_ref[...].astype(w_ref.dtype),
                         preferred_element_type=jnp.float32).astype(o_ref.dtype)


def prepare_fern_weights(weights, D_out):
    """(M, 2^K, D_out) -> (D_out, M*2^K) bf16.  Cacheable across forward calls
    (hoist out of the per-call path in real use)."""
    M, nwords, d = weights.shape
    assert d == D_out
    w2 = jnp.transpose(weights, (2, 0, 1)).reshape(D_out, M * nwords)
    return w2.astype(jnp.bfloat16)


def fern_sparse_table(x, weights, *, K, num_of_ferns, num_of_active_words, D_out,
                      l_tile=1024):
    """x: (N, M*K, H, W); weights: (M, 2^K, D_out) -> (N, D_out, H, W) f32."""
    M, P = num_of_ferns, num_of_active_words
    N, MK, H, W = x.shape
    assert MK == M * K
    nwords = 1 << K
    HW = H * W

    # Free reshape (no transpose / pad / extra HBM pass): (N, MK, H*W).
    x3 = x.reshape(N, MK, HW)

    # VMEM footprint for a lane tile `lt`:
    #   2x double-buffered x tile (f32) + 2x out tile (f32) + votes scratch (f32)
    #   + 2x bf16 weight table (double-buffered; constant index_map so DMA'd once).
    def footprint(lt):
        return 4 * lt * (2 * MK + 2 * D_out + M * nwords) + 2 * 2 * D_out * M * nwords

    # Lane tile: multiple of 128, capped by the (128-padded) spatial extent and a
    # budget that holds on v7x (64 MiB VMEM) and v5e (16 MiB default scoped).
    lt = max(128, min(_round_up(l_tile, 128), _round_up(HW, 128)))
    while lt > 128 and footprint(lt) > 24 * 1024 * 1024:
        lt -= 128
    vmem_limit = int(min(96 * 1024 * 1024,
                         max(32 * 1024 * 1024, 2 * footprint(lt))))

    w2 = prepare_fern_weights(weights, D_out)

    out3 = pl.pallas_call(
        partial(_fern_kernel, K=K, M=M, P=P, D_out=D_out),
        out_shape=jax.ShapeDtypeStruct((N, D_out, HW), jnp.float32),
        grid_spec=pltpu.PrefetchScalarGridSpec(
            num_scalar_prefetch=0,
            # No padding: pl.cdiv handles a ragged last lane tile; partial output
            # blocks only write the valid region, so no output slice either.
            grid=(N, pl.cdiv(HW, lt)),
            in_specs=[pl.BlockSpec((None, MK, lt), lambda n, i: (n, 0, i)),
                      pl.BlockSpec((D_out, M * nwords), lambda n, i: (0, 0))],
            out_specs=pl.BlockSpec((None, D_out, lt), lambda n, i: (n, 0, i)),
            scratch_shapes=[pltpu.VMEM((M * nwords, lt), jnp.float32)]),
        compiler_params=pltpu.CompilerParams(
            dimension_semantics=("parallel", "parallel"),
            vmem_limit_bytes=vmem_limit),
    )(x3, w2)

    return out3.reshape(N, D_out, H, W)


def fern_reference_np(x, weights, *, K, M, P, D_out):
    """Pure numpy reference mirroring the PyTorch forward pass."""
    x = np.asarray(x, dtype=np.float32)
    w = np.asarray(weights, dtype=np.float64)
    N, MK, H, W = x.shape
    LP = int(round(math.log2(P)))
    nwords = 1 << K
    out = np.zeros((N, D_out, H, W), np.float64)
    kk = np.arange(K).reshape(1, K, 1, 1)
    for m in range(M):
        T = x[:, m * K:(m + 1) * K]
        TB = np.rint(T).astype(np.int64)
        WB = np.zeros((N, H, W), np.int64)
        for k in range(K):
            WB = (WB << 1) + TB[:, k]
        BA = np.abs(T - np.float32(0.5))
        words = np.repeat(WB[:, None], P, axis=1)                 # (N,P,H,W)
        acts = np.ones((N, P, H, W), np.float32)
        bit_idx = np.arange(P)
        for j in range(LP):
            a_j = np.argmin(BA, axis=1)                           # first min index
            sel = (kk == a_j[:, None])
            v_j = np.sum(np.where(sel, T, np.float32(0.0)), axis=1)
            BA = BA + sel.astype(np.float32)
            mask = (1 << (K - 1 - a_j)).astype(np.int64)
            bitp = ((bit_idx >> j) & 1).reshape(1, P, 1, 1)
            words = np.where(bitp == 1, words | mask[:, None],
                             words & (mask[:, None] ^ (nwords - 1)))
            upd = np.where(bitp == 1, v_j[:, None], np.float32(1.0) - v_j[:, None])
            acts = acts * upd.astype(np.float32)
        onehot = (words[..., None] == np.arange(nwords))          # (N,P,H,W,2^K)
        votes = np.sum(acts[..., None].astype(np.float64) * onehot, axis=1)
        out = out + np.einsum('nhwc,cd->ndhw', votes, w[m])
    return out.astype(np.float32)


if __name__ == "__main__":
    # Small shapes consistent with the module: N=2, K=4 bit functions, M=2 ferns
    # (so channels = M*K = 8), P=4 active words (LP=2), D_out=8, H=W=16.
    N, K, M, P, D_out, H, W = 2, 4, 2, 4, 8, 16, 16

    key = jax.random.PRNGKey(0)
    x = jax.random.uniform(key, (N, M * K, H, W), dtype=jnp.float32)

    # Deterministic parameter init, exactly as the module's __init__:
    # weights[m, word, d] = word.
    weights = jnp.broadcast_to(
        jnp.arange(1 << K, dtype=jnp.float32)[None, :, None], (M, 1 << K, D_out))

    out = fern_sparse_table(x, weights, K=K, num_of_ferns=M,
                            num_of_active_words=P, D_out=D_out)
    out = jax.block_until_ready(out)

    assert out.shape == (N, D_out, H, W)
    ref = fern_reference_np(np.asarray(x), np.asarray(weights),
                            K=K, M=M, P=P, D_out=D_out)
    # bf16 single-pass MXU: ~2^-8 relative error on votes*weights.  A semantic bug
    # (wrong word / wrong activation) shows up as O(1) differences, far above this.
    np.testing.assert_allclose(np.asarray(out), ref, rtol=2e-2, atol=1e-2)
    print("KERNEL_OK")
</pallas_src>

<mosaic_0001>
module attributes {stable_mosaic.version = 11 : i64} {
  func.func @_fern_kernel(%arg0: i32, %arg1: i32, %arg2: memref<1x8x256xf32, #tpu.memory_space<vmem>>, %arg3: memref<8x32xbf16, #tpu.memory_space<vmem>>, %arg4: memref<1x8x256xf32, #tpu.memory_space<vmem>>, %arg5: memref<32x256xf32, #tpu.memory_space<vmem>>) attributes {dimension_semantics = [#tpu.dimension_semantics<parallel>, #tpu.dimension_semantics<parallel>], iteration_bounds = array<i64: 2, 1>, scalar_prefetch = 0 : i64, scratch_operands = 1 : i64, tpu.core_type = #tpu.core_type<tc>, window_params = [{transform_indices = @transform_0, window_bounds = array<i64: 1, 8, 256>}, {pipeline_mode = #tpu.pipeline_mode<synchronous>, transform_indices = @transform_1, window_bounds = array<i64: 8, 32>}, {transform_indices = @transform_2, window_bounds = array<i64: 1, 8, 256>}]} {
    %0 = tpu.iota {dimensions = array<i32: 0>} : vector<16x256xi32>
    %1 = tpu.iota {dimensions = array<i32: 0>} : vector<4x256xi32>
    %2 = tpu.iota {dimensions = array<i32: 0>} : vector<4x1xi32>
    %c3_i32 = arith.constant 3 : i32
    %3 = vector.broadcast %c3_i32 : i32 to vector<4x1xi32>
    %4 = arith.subi %3, %2 : vector<4x1xi32>
    %c1_i32 = arith.constant 1 : i32
    %5 = vector.broadcast %c1_i32 : i32 to vector<4x1xi32>
    %6 = arith.shli %5, %4 : vector<4x1xi32>
    %7 = tpu.iota {dimensions = array<i32: 0>} : vector<4x1xi32>
    %c0_i32 = arith.constant 0 : i32
    %8 = vector.broadcast %c0_i32 : i32 to vector<4x1xi32>
    %9 = arith.shrsi %7, %8 : vector<4x1xi32>
    %c1_i32_0 = arith.constant 1 : i32
    %10 = vector.broadcast %c1_i32_0 : i32 to vector<4x1xi32>
    %11 = arith.andi %9, %10 : vector<4x1xi32>
    %c1_i32_1 = arith.constant 1 : i32
    %12 = vector.broadcast %c1_i32_1 : i32 to vector<4x1xi32>
    %13 = arith.cmpi eq, %11, %12 : vector<4x1xi32>
    %c1_i32_2 = arith.constant 1 : i32
    %14 = vector.broadcast %c1_i32_2 : i32 to vector<4x1xi32>
    %15 = arith.shrsi %7, %14 : vector<4x1xi32>
    %c1_i32_3 = arith.constant 1 : i32
    %16 = vector.broadcast %c1_i32_3 : i32 to vector<4x1xi32>
    %17 = arith.andi %15, %16 : vector<4x1xi32>
    %c1_i32_4 = arith.constant 1 : i32
    %18 = vector.broadcast %c1_i32_4 : i32 to vector<4x1xi32>
    %19 = arith.cmpi eq, %17, %18 : vector<4x1xi32>
    %c0 = arith.constant 0 : index
    %c0_5 = arith.constant 0 : index
    %c0_6 = arith.constant 0 : index
    %20 = vector.load %arg2[%c0, %c0_5, %c0_6] : memref<1x8x256xf32, #tpu.memory_space<vmem>>, vector<1x4x256xf32>
    %21 = vector.shape_cast %20 : vector<1x4x256xf32> to vector<4x256xf32>
    %22 = math.roundeven %21 : vector<4x256xf32>
    %23 = arith.fptosi %22 : vector<4x256xf32> to vector<4x256xi32>
    %24 = vector.broadcast %6 : vector<4x1xi32> to vector<4x256xi32>
    %25 = arith.muli %23, %24 : vector<4x256xi32>
    %cst = arith.constant dense<0> : vector<256xi32>
    %26 = vector.multi_reduction <add>, %25, %cst [0] : vector<4x256xi32> to vector<256xi32>
    %27 = vector.shape_cast %26 : vector<256xi32> to vector<1x256xi32>
    %cst_7 = arith.constant 5.000000e-01 : f32
    %28 = vector.broadcast %cst_7 : f32 to vector<4x256xf32>
    %29 = arith.subf %21, %28 : vector<4x256xf32>
    %30 = math.absf %29 : vector<4x256xf32>
    %31 = vector.shape_cast %27 : vector<1x256xi32> to vector<1x256xi32>
    %32 = vector.broadcast %31 : vector<1x256xi32> to vector<4x256xi32>
    %cst_8 = arith.constant 1.000000e+00 : f32
    %33 = vector.broadcast %cst_8 : f32 to vector<4x256xf32>
    %cst_9 = arith.constant dense<0x7F800000> : vector<256xf32>
    %34 = vector.multi_reduction <minimumf>, %30, %cst_9 [0] : vector<4x256xf32> to vector<256xf32>
    %35 = vector.shape_cast %34 : vector<256xf32> to vector<1x256xf32>
    %36 = vector.broadcast %35 : vector<1x256xf32> to vector<4x256xf32>
    %37 = arith.cmpf oeq, %30, %36 : vector<4x256xf32>
    %c4_i32 = arith.constant 4 : i32
    %38 = vector.broadcast %c4_i32 : i32 to vector<4x256xi32>
    %39 = arith.select %37, %1, %38 : vector<4x256xi1>, vector<4x256xi32>
    %cst_10 = arith.constant dense<2147483647> : vector<256xi32>
    %40 = vector.multi_reduction <minsi>, %39, %cst_10 [0] : vector<4x256xi32> to vector<256xi32>
    %41 = vector.shape_cast %40 : vector<256xi32> to vector<1x256xi32>
    %42 = vector.broadcast %41 : vector<1x256xi32> to vector<4x256xi32>
    %43 = arith.cmpi eq, %1, %42 : vector<4x256xi32>
    %cst_11 = arith.constant 0.000000e+00 : f32
    %44 = vector.broadcast %cst_11 : f32 to vector<4x256xf32>
    %45 = arith.select %43, %21, %44 : vector<4x256xi1>, vector<4x256xf32>
    %cst_12 = arith.constant dense<0.000000e+00> : vector<256xf32>
    %46 = vector.multi_reduction <add>, %45, %cst_12 [0] : vector<4x256xf32> to vector<256xf32>
    %47 = vector.shape_cast %46 : vector<256xf32> to vector<1x256xf32>
    %48 = arith.extui %43 : vector<4x256xi1> to vector<4x256xi32>
    %49 = arith.sitofp %48 : vector<4x256xi32> to vector<4x256xf32>
    %50 = arith.addf %30, %49 : vector<4x256xf32>
    %c3_i32_13 = arith.constant 3 : i32
    %51 = vector.broadcast %c3_i32_13 : i32 to vector<1x256xi32>
    %52 = arith.subi %51, %41 : vector<1x256xi32>
    %c1_i32_14 = arith.constant 1 : i32
    %53 = vector.broadcast %c1_i32_14 : i32 to vector<1x256xi32>
    %54 = arith.shli %53, %52 : vector<1x256xi32>
    %55 = vector.broadcast %54 : vector<1x256xi32> to vector<4x256xi32>
    %56 = arith.ori %32, %55 : vector<4x256xi32>
    %c15_i32 = arith.constant 15 : i32
    %57 = vector.broadcast %c15_i32 : i32 to vector<1x256xi32>
    %58 = arith.xori %54, %57 : vector<1x256xi32>
    %59 = vector.broadcast %58 : vector<1x256xi32> to vector<4x256xi32>
    %60 = arith.andi %32, %59 : vector<4x256xi32>
    %61 = vector.shape_cast %13 : vector<4x1xi1> to vector<4x1xi1>
    %62 = vector.broadcast %61 : vector<4x1xi1> to vector<4x256xi1>
    %63 = arith.select %62, %56, %60 : vector<4x256xi1>, vector<4x256xi32>
    %cst_15 = arith.constant 1.000000e+00 : f32
    %64 = vector.broadcast %cst_15 : f32 to vector<1x256xf32>
    %65 = arith.subf %64, %47 : vector<1x256xf32>
    %66 = vector.shape_cast %13 : vector<4x1xi1> to vector<4x1xi1>
    %67 = vector.broadcast %66 : vector<4x1xi1> to vector<4x256xi1>
    %68 = vector.shape_cast %47 : vector<1x256xf32> to vector<1x256xf32>
    %69 = vector.broadcast %68 : vector<1x256xf32> to vector<4x256xf32>
    %70 = vector.shape_cast %65 : vector<1x256xf32> to vector<1x256xf32>
    %71 = vector.broadcast %70 : vector<1x256xf32> to vector<4x256xf32>
    %72 = arith.select %67, %69, %71 : vector<4x256xi1>, vector<4x256xf32>
    %73 = arith.mulf %33, %72 : vector<4x256xf32>
    %cst_16 = arith.constant dense<0x7F800000> : vector<256xf32>
    %74 = vector.multi_reduction <minimumf>, %50, %cst_16 [0] : vector<4x256xf32> to vector<256xf32>
    %75 = vector.shape_cast %74 : vector<256xf32> to vector<1x256xf32>
    %76 = vector.broadcast %75 : vector<1x256xf32> to vector<4x256xf32>
    %77 = arith.cmpf oeq, %50, %76 : vector<4x256xf32>
    %c4_i32_17 = arith.constant 4 : i32
    %78 = vector.broadcast %c4_i32_17 : i32 to vector<4x256xi32>
    %79 = arith.select %77, %1, %78 : vector<4x256xi1>, vector<4x256xi32>
    %cst_18 = arith.constant dense<2147483647> : vector<256xi32>
    %80 = vector.multi_reduction <minsi>, %79, %cst_18 [0] : vector<4x256xi32> to vector<256xi32>
    %81 = vector.shape_cast %80 : vector<256xi32> to vector<1x256xi32>
    %82 = vector.broadcast %81 : vector<1x256xi32> to vector<4x256xi32>
    %83 = arith.cmpi eq, %1, %82 : vector<4x256xi32>
    %cst_19 = arith.constant 0.000000e+00 : f32
    %84 = vector.broadcast %cst_19 : f32 to vector<4x256xf32>
    %85 = arith.select %83, %21, %84 : vector<4x256xi1>, vector<4x256xf32>
    %cst_20 = arith.constant dense<0.000000e+00> : vector<256xf32>
    %86 = vector.multi_reduction <add>, %85, %cst_20 [0] : vector<4x256xf32> to vector<256xf32>
    %87 = vector.shape_cast %86 : vector<256xf32> to vector<1x256xf32>
    %c3_i32_21 = arith.constant 3 : i32
    %88 = vector.broadcast %c3_i32_21 : i32 to vector<1x256xi32>
    %89 = arith.subi %88, %81 : vector<1x256xi32>
    %c1_i32_22 = arith.constant 1 : i32
    %90 = vector.broadcast %c1_i32_22 : i32 to vector<1x256xi32>
    %91 = arith.shli %90, %89 : vector<1x256xi32>
    %92 = vector.broadcast %91 : vector<1x256xi32> to vector<4x256xi32>
    %93 = arith.ori %63, %92 : vector<4x256xi32>
    %c15_i32_23 = arith.constant 15 : i32
    %94 = vector.broadcast %c15_i32_23 : i32 to vector<1x256xi32>
    %95 = arith.xori %91, %94 : vector<1x256xi32>
    %96 = vector.broadcast %95 : vector<1x256xi32> to vector<4x256xi32>
    %97 = arith.andi %63, %96 : vector<4x256xi32>
    %98 = vector.shape_cast %19 : vector<4x1xi1> to vector<4x1xi1>
    %99 = vector.broadcast %98 : vector<4x1xi1> to vector<4x256xi1>
    %100 = arith.select %99, %93, %97 : vector<4x256xi1>, vector<4x256xi32>
    %cst_24 = arith.constant 1.000000e+00 : f32
    %101 = vector.broadcast %cst_24 : f32 to vector<1x256xf32>
    %102 = arith.subf %101, %87 : vector<1x256xf32>
    %103 = vector.shape_cast %19 : vector<4x1xi1> to vector<4x1xi1>
    %104 = vector.broadcast %103 : vector<4x1xi1> to vector<4x256xi1>
    %105 = vector.shape_cast %87 : vector<1x256xf32> to vector<1x256xf32>
    %106 = vector.broadcast %105 : vector<1x256xf32> to vector<4x256xf32>
    %107 = vector.shape_cast %102 : vector<1x256xf32> to vector<1x256xf32>
    %108 = vector.broadcast %107 : vector<1x256xf32> to vector<4x256xf32>
    %109 = arith.select %104, %106, %108 : vector<4x256xi1>, vector<4x256xf32>
    %110 = arith.mulf %73, %109 : vector<4x256xf32>
    %cst_25 = arith.constant 0.000000e+00 : f32
    %111 = vector.broadcast %cst_25 : f32 to vector<16x256xf32>
    %112 = vector.extract_strided_slice %100 {offsets = [0, 0], sizes = [1, 256], strides = [1, 1]} : vector<4x256xi32> to vector<1x256xi32>
    %113 = vector.broadcast %112 : vector<1x256xi32> to vector<16x256xi32>
    %114 = arith.cmpi eq, %0, %113 : vector<16x256xi32>
    %115 = vector.extract_strided_slice %110 {offsets = [0, 0], sizes = [1, 256], strides = [1, 1]} : vector<4x256xf32> to vector<1x256xf32>
    %cst_26 = arith.constant 0.000000e+00 : f32
    %116 = vector.shape_cast %115 : vector<1x256xf32> to vector<1x256xf32>
    %117 = vector.broadcast %116 : vector<1x256xf32> to vector<16x256xf32>
    %118 = vector.broadcast %cst_26 : f32 to vector<16x256xf32>
    %119 = arith.select %114, %117, %118 : vector<16x256xi1>, vector<16x256xf32>
    %120 = arith.addf %111, %119 : vector<16x256xf32>
    %121 = vector.extract_strided_slice %100 {offsets = [1, 0], sizes = [1, 256], strides = [1, 1]} : vector<4x256xi32> to vector<1x256xi32>
    %122 = vector.broadcast %121 : vector<1x256xi32> to vector<16x256xi32>
    %123 = arith.cmpi eq, %0, %122 : vector<16x256xi32>
    %124 = vector.extract_strided_slice %110 {offsets = [1, 0], sizes = [1, 256], strides = [1, 1]} : vector<4x256xf32> to vector<1x256xf32>
    %cst_27 = arith.constant 0.000000e+00 : f32
    %125 = vector.shape_cast %124 : vector<1x256xf32> to vector<1x256xf32>
    %126 = vector.broadcast %125 : vector<1x256xf32> to vector<16x256xf32>
    %127 = vector.broadcast %cst_27 : f32 to vector<16x256xf32>
    %128 = arith.select %123, %126, %127 : vector<16x256xi1>, vector<16x256xf32>
    %129 = arith.addf %120, %128 : vector<16x256xf32>
    %130 = vector.extract_strided_slice %100 {offsets = [2, 0], sizes = [1, 256], strides = [1, 1]} : vector<4x256xi32> to vector<1x256xi32>
    %131 = vector.broadcast %130 : vector<1x256xi32> to vector<16x256xi32>
    %132 = arith.cmpi eq, %0, %131 : vector<16x256xi32>
    %133 = vector.extract_strided_slice %110 {offsets = [2, 0], sizes = [1, 256], strides = [1, 1]} : vector<4x256xf32> to vector<1x256xf32>
    %cst_28 = arith.constant 0.000000e+00 : f32
    %134 = vector.shape_cast %133 : vector<1x256xf32> to vector<1x256xf32>
    %135 = vector.broadcast %134 : vector<1x256xf32> to vector<16x256xf32>
    %136 = vector.broadcast %cst_28 : f32 to vector<16x256xf32>
    %137 = arith.select %132, %135, %136 : vector<16x256xi1>, vector<16x256xf32>
    %138 = arith.addf %129, %137 : vector<16x256xf32>
    %139 = vector.extract_strided_slice %100 {offsets = [3, 0], sizes = [1, 256], strides = [1, 1]} : vector<4x256xi32> to vector<1x256xi32>
    %140 = vector.broadcast %139 : vector<1x256xi32> to vector<16x256xi32>
    %141 = arith.cmpi eq, %0, %140 : vector<16x256xi32>
    %142 = vector.extract_strided_slice %110 {offsets = [3, 0], sizes = [1, 256], strides = [1, 1]} : vector<4x256xf32> to vector<1x256xf32>
    %cst_29 = arith.constant 0.000000e+00 : f32
    %143 = vector.shape_cast %142 : vector<1x256xf32> to vector<1x256xf32>
    %144 = vector.broadcast %143 : vector<1x256xf32> to vector<16x256xf32>
    %145 = vector.broadcast %cst_29 : f32 to vector<16x256xf32>
    %146 = arith.select %141, %144, %145 : vector<16x256xi1>, vector<16x256xf32>
    %147 = arith.addf %138, %146 : vector<16x256xf32>
    %c0_30 = arith.constant 0 : index
    %c0_31 = arith.constant 0 : index
    %148 = vector.load %arg5[%c0_30, %c0_31] : memref<32x256xf32, #tpu.memory_space<vmem>>, vector<16x256xf32>
    tpu.vector_store %arg5[%c0_30, %c0_31], %147 {strides = array<i32>} : memref<32x256xf32, #tpu.memory_space<vmem>>, vector<16x256xf32>,
    %c0_32 = arith.constant 0 : index
    %c4 = arith.constant 4 : index
    %c0_33 = arith.constant 0 : index
    %149 = vector.load %arg2[%c0_32, %c4, %c0_33] : memref<1x8x256xf32, #tpu.memory_space<vmem>>, vector<1x4x256xf32>
    %150 = vector.shape_cast %149 : vector<1x4x256xf32> to vector<4x256xf32>
    %151 = math.roundeven %150 : vector<4x256xf32>
    %152 = arith.fptosi %151 : vector<4x256xf32> to vector<4x256xi32>
    %153 = vector.broadcast %6 : vector<4x1xi32> to vector<4x256xi32>
    %154 = arith.muli %152, %153 : vector<4x256xi32>
    %cst_34 = arith.constant dense<0> : vector<256xi32>
    %155 = vector.multi_reduction <add>, %154, %cst_34 [0] : vector<4x256xi32> to vector<256xi32>
    %156 = vector.shape_cast %155 : vector<256xi32> to vector<1x256xi32>
    %cst_35 = arith.constant 5.000000e-01 : f32
    %157 = vector.broadcast %cst_35 : f32 to vector<4x256xf32>
    %158 = arith.subf %150, %157 : vector<4x256xf32>
    %159 = math.absf %158 : vector<4x256xf32>
    %160 = vector.shape_cast %156 : vector<1x256xi32> to vector<1x256xi32>
    %161 = vector.broadcast %160 : vector<1x256xi32> to vector<4x256xi32>
    %cst_36 = arith.constant 1.000000e+00 : f32
    %162 = vector.broadcast %cst_36 : f32 to vector<4x256xf32>
    %cst_37 = arith.constant dense<0x7F800000> : vector<256xf32>
    %163 = vector.multi_reduction <minimumf>, %159, %cst_37 [0] : vector<4x256xf32> to vector<256xf32>
    %164 = vector.shape_cast %163 : vector<256xf32> to vector<1x256xf32>
    %165 = vector.broadcast %164 : vector<1x256xf32> to vector<4x256xf32>
    %166 = arith.cmpf oeq, %159, %165 : vector<4x256xf32>
    %c4_i32_38 = arith.constant 4 : i32
    %167 = vector.broadcast %c4_i32_38 : i32 to vector<4x256xi32>
    %168 = arith.select %166, %1, %167 : vector<4x256xi1>, vector<4x256xi32>
    %cst_39 = arith.constant dense<2147483647> : vector<256xi32>
    %169 = vector.multi_reduction <minsi>, %168, %cst_39 [0] : vector<4x256xi32> to vector<256xi32>
    %170 = vector.shape_cast %169 : vector<256xi32> to vector<1x256xi32>
    %171 = vector.broadcast %170 : vector<1x256xi32> to vector<4x256xi32>
    %172 = arith.cmpi eq, %1, %171 : vector<4x256xi32>
    %cst_40 = arith.constant 0.000000e+00 : f32
    %173 = vector.broadcast %cst_40 : f32 to vector<4x256xf32>
    %174 = arith.select %172, %150, %173 : vector<4x256xi1>, vector<4x256xf32>
    %cst_41 = arith.constant dense<0.000000e+00> : vector<256xf32>
    %175 = vector.multi_reduction <add>, %174, %cst_41 [0] : vector<4x256xf32> to vector<256xf32>
    %176 = vector.shape_cast %175 : vector<256xf32> to vector<1x256xf32>
    %177 = arith.extui %172 : vector<4x256xi1> to vector<4x256xi32>
    %178 = arith.sitofp %177 : vector<4x256xi32> to vector<4x256xf32>
    %179 = arith.addf %159, %178 : vector<4x256xf32>
    %c3_i32_42 = arith.constant 3 : i32
    %180 = vector.broadcast %c3_i32_42 : i32 to vector<1x256xi32>
    %181 = arith.subi %180, %170 : vector<1x256xi32>
    %c1_i32_43 = arith.constant 1 : i32
    %182 = vector.broadcast %c1_i32_43 : i32 to vector<1x256xi32>
    %183 = arith.shli %182, %181 : vector<1x256xi32>
    %184 = vector.broadcast %183 : vector<1x256xi32> to vector<4x256xi32>
    %185 = arith.ori %161, %184 : vector<4x256xi32>
    %c15_i32_44 = arith.constant 15 : i32
    %186 = vector.broadcast %c15_i32_44 : i32 to vector<1x256xi32>
    %187 = arith.xori %183, %186 : vector<1x256xi32>
    %188 = vector.broadcast %187 : vector<1x256xi32> to vector<4x256xi32>
    %189 = arith.andi %161, %188 : vector<4x256xi32>
    %190 = vector.shape_cast %13 : vector<4x1xi1> to vector<4x1xi1>
    %191 = vector.broadcast %190 : vector<4x1xi1> to vector<4x256xi1>
    %192 = arith.select %191, %185, %189 : vector<4x256xi1>, vector<4x256xi32>
    %cst_45 = arith.constant 1.000000e+00 : f32
    %193 = vector.broadcast %cst_45 : f32 to vector<1x256xf32>
    %194 = arith.subf %193, %176 : vector<1x256xf32>
    %195 = vector.shape_cast %13 : vector<4x1xi1> to vector<4x1xi1>
    %196 = vector.broadcast %195 : vector<4x1xi1> to vector<4x256xi1>
    %197 = vector.shape_cast %176 : vector<1x256xf32> to vector<1x256xf32>
    %198 = vector.broadcast %197 : vector<1x256xf32> to vector<4x256xf32>
    %199 = vector.shape_cast %194 : vector<1x256xf32> to vector<1x256xf32>
    %200 = vector.broadcast %199 : vector<1x256xf32> to vector<4x256xf32>
    %201 = arith.select %196, %198, %200 : vector<4x256xi1>, vector<4x256xf32>
    %202 = arith.mulf %162, %201 : vector<4x256xf32>
    %cst_46 = arith.constant dense<0x7F800000> : vector<256xf32>
    %203 = vector.multi_reduction <minimumf>, %179, %cst_46 [0] : vector<4x256xf32> to vector<256xf32>
    %204 = vector.shape_cast %203 : vector<256xf32> to vector<1x256xf32>
    %205 = vector.broadcast %204 : vector<1x256xf32> to vector<4x256xf32>
    %206 = arith.cmpf oeq, %179, %205 : vector<4x256xf32>
    %c4_i32_47 = arith.constant 4 : i32
    %207 = vector.broadcast %c4_i32_47 : i32 to vector<4x256xi32>
    %208 = arith.select %206, %1, %207 : vector<4x256xi1>, vector<4x256xi32>
    %cst_48 = arith.constant dense<2147483647> : vector<256xi32>
    %209 = vector.multi_reduction <minsi>, %208, %cst_48 [0] : vector<4x256xi32> to vector<256xi32>
    %210 = vector.shape_cast %209 : vector<256xi32> to vector<1x256xi32>
    %211 = vector.broadcast %210 : vector<1x256xi32> to vector<4x256xi32>
    %212 = arith.cmpi eq, %1, %211 : vector<4x256xi32>
    %cst_49 = arith.constant 0.000000e+00 : f32
    %213 = vector.broadcast %cst_49 : f32 to vector<4x256xf32>
    %214 = arith.select %212, %150, %213 : vector<4x256xi1>, vector<4x256xf32>
    %cst_50 = arith.constant dense<0.000000e+00> : vector<256xf32>
    %215 = vector.multi_reduction <add>, %214, %cst_50 [0] : vector<4x256xf32> to vector<256xf32>
    %216 = vector.shape_cast %215 : vector<256xf32> to vector<1x256xf32>
    %c3_i32_51 = arith.constant 3 : i32
    %217 = vector.broadcast %c3_i32_51 : i32 to vector<1x256xi32>
    %218 = arith.subi %217, %210 : vector<1x256xi32>
    %c1_i32_52 = arith.constant 1 : i32
    %219 = vector.broadcast %c1_i32_52 : i32 to vector<1x256xi32>
    %220 = arith.shli %219, %218 : vector<1x256xi32>
    %221 = vector.broadcast %220 : vector<1x256xi32> to vector<4x256xi32>
    %222 = arith.ori %192, %221 : vector<4x256xi32>
    %c15_i32_53 = arith.constant 15 : i32
    %223 = vector.broadcast %c15_i32_53 : i32 to vector<1x256xi32>
    %224 = arith.xori %220, %223 : vector<1x256xi32>
    %225 = vector.broadcast %224 : vector<1x256xi32> to vector<4x256xi32>
    %226 = arith.andi %192, %225 : vector<4x256xi32>
    %227 = vector.shape_cast %19 : vector<4x1xi1> to vector<4x1xi1>
    %228 = vector.broadcast %227 : vector<4x1xi1> to vector<4x256xi1>
    %229 = arith.select %228, %222, %226 : vector<4x256xi1>, vector<4x256xi32>
    %cst_54 = arith.constant 1.000000e+00 : f32
    %230 = vector.broadcast %cst_54 : f32 to vector<1x256xf32>
    %231 = arith.subf %230, %216 : vector<1x256xf32>
    %232 = vector.shape_cast %19 : vector<4x1xi1> to vector<4x1xi1>
    %233 = vector.broadcast %232 : vector<4x1xi1> to vector<4x256xi1>
    %234 = vector.shape_cast %216 : vector<1x256xf32> to vector<1x256xf32>
    %235 = vector.broadcast %234 : vector<1x256xf32> to vector<4x256xf32>
    %236 = vector.shape_cast %231 : vector<1x256xf32> to vector<1x256xf32>
    %237 = vector.broadcast %236 : vector<1x256xf32> to vector<4x256xf32>
    %238 = arith.select %233, %235, %237 : vector<4x256xi1>, vector<4x256xf32>
    %239 = arith.mulf %202, %238 : vector<4x256xf32>
    %cst_55 = arith.constant 0.000000e+00 : f32
    %240 = vector.broadcast %cst_55 : f32 to vector<16x256xf32>
    %241 = vector.extract_strided_slice %229 {offsets = [0, 0], sizes = [1, 256], strides = [1, 1]} : vector<4x256xi32> to vector<1x256xi32>
    %242 = vector.broadcast %241 : vector<1x256xi32> to vector<16x256xi32>
    %243 = arith.cmpi eq, %0, %242 : vector<16x256xi32>
    %244 = vector.extract_strided_slice %239 {offsets = [0, 0], sizes = [1, 256], strides = [1, 1]} : vector<4x256xf32> to vector<1x256xf32>
    %cst_56 = arith.constant 0.000000e+00 : f32
    %245 = vector.shape_cast %244 : vector<1x256xf32> to vector<1x256xf32>
    %246 = vector.broadcast %245 : vector<1x256xf32> to vector<16x256xf32>
    %247 = vector.broadcast %cst_56 : f32 to vector<16x256xf32>
    %248 = arith.select %243, %246, %247 : vector<16x256xi1>, vector<16x256xf32>
    %249 = arith.addf %240, %248 : vector<16x256xf32>
    %250 = vector.extract_strided_slice %229 {offsets = [1, 0], sizes = [1, 256], strides = [1, 1]} : vector<4x256xi32> to vector<1x256xi32>
    %251 = vector.broadcast %250 : vector<1x256xi32> to vector<16x256xi32>
    %252 = arith.cmpi eq, %0, %251 : vector<16x256xi32>
    %253 = vector.extract_strided_slice %239 {offsets = [1, 0], sizes = [1, 256], strides = [1, 1]} : vector<4x256xf32> to vector<1x256xf32>
    %cst_57 = arith.constant 0.000000e+00 : f32
    %254 = vector.shape_cast %253 : vector<1x256xf32> to vector<1x256xf32>
    %255 = vector.broadcast %254 : vector<1x256xf32> to vector<16x256xf32>
    %256 = vector.broadcast %cst_57 : f32 to vector<16x256xf32>
    %257 = arith.select %252, %255, %256 : vector<16x256xi1>, vector<16x256xf32>
    %258 = arith.addf %249, %257 : vector<16x256xf32>
    %259 = vector.extract_strided_slice %229 {offsets = [2, 0], sizes = [1, 256], strides = [1, 1]} : vector<4x256xi32> to vector<1x256xi32>
    %260 = vector.broadcast %259 : vector<1x256xi32> to vector<16x256xi32>
    %261 = arith.cmpi eq, %0, %260 : vector<16x256xi32>
    %262 = vector.extract_strided_slice %239 {offsets = [2, 0], sizes = [1, 256], strides = [1, 1]} : vector<4x256xf32> to vector<1x256xf32>
    %cst_58 = arith.constant 0.000000e+00 : f32
    %263 = vector.shape_cast %262 : vector<1x256xf32> to vector<1x256xf32>
    %264 = vector.broadcast %263 : vector<1x256xf32> to vector<16x256xf32>
    %265 = vector.broadcast %cst_58 : f32 to vector<16x256xf32>
    %266 = arith.select %261, %264, %265 : vector<16x256xi1>, vector<16x256xf32>
    %267 = arith.addf %258, %266 : vector<16x256xf32>
    %268 = vector.extract_strided_slice %229 {offsets = [3, 0], sizes = [1, 256], strides = [1, 1]} : vector<4x256xi32> to vector<1x256xi32>
    %269 = vector.broadcast %268 : vector<1x256xi32> to vector<16x256xi32>
    %270 = arith.cmpi eq, %0, %269 : vector<16x256xi32>
    %271 = vector.extract_strided_slice %239 {offsets = [3, 0], sizes = [1, 256], strides = [1, 1]} : vector<4x256xf32> to vector<1x256xf32>
    %cst_59 = arith.constant 0.000000e+00 : f32
    %272 = vector.shape_cast %271 : vector<1x256xf32> to vector<1x256xf32>
    %273 = vector.broadcast %272 : vector<1x256xf32> to vector<16x256xf32>
    %274 = vector.broadcast %cst_59 : f32 to vector<16x256xf32>
    %275 = arith.select %270, %273, %274 : vector<16x256xi1>, vector<16x256xf32>
    %276 = arith.addf %267, %275 : vector<16x256xf32>
    %c16 = arith.constant 16 : index
    %c0_60 = arith.constant 0 : index
    %277 = vector.load %arg5[%c16, %c0_60] : memref<32x256xf32, #tpu.memory_space<vmem>>, vector<16x256xf32>
    tpu.vector_store %arg5[%c16, %c0_60], %276 {strides = array<i32>} : memref<32x256xf32, #tpu.memory_space<vmem>>, vector<16x256xf32>,
    %c0_61 = arith.constant 0 : index
    %c0_62 = arith.constant 0 : index
    %278 = vector.load %arg3[%c0_61, %c0_62] : memref<8x32xbf16, #tpu.memory_space<vmem>>, vector<8x32xbf16>
    %c0_63 = arith.constant 0 : index
    %c0_64 = arith.constant 0 : index
    %279 = vector.load %arg5[%c0_63, %c0_64] : memref<32x256xf32, #tpu.memory_space<vmem>>, vector<32x256xf32>
    %280 = arith.truncf %279 : vector<32x256xf32> to vector<32x256xbf16>
    %cst_65 = arith.constant dense<0.000000e+00> : vector<8x256xf32>
    %281 = tpu.matmul %278, %280, %cst_65 {dimension_numbers = #tpu.dot_dimension_numbers<[1], [0], [0], [1], [0, 0, 1, 1], [], []>} : vector<8x32xbf16>, vector<32x256xbf16>, vector<8x256xf32> -> vector<8x256xf32>
    %c0_66 = arith.constant 0 : index
    %c0_67 = arith.constant 0 : index
    %c0_68 = arith.constant 0 : index
    %282 = vector.load %arg4[%c0_66, %c0_67, %c0_68] : memref<1x8x256xf32, #tpu.memory_space<vmem>>, vector<1x8x256xf32>
    %283 = vector.shape_cast %282 : vector<1x8x256xf32> to vector<8x256xf32>
    %284 = vector.shape_cast %281 : vector<8x256xf32> to vector<1x8x256xf32>
    tpu.vector_store %arg4[%c0_66, %c0_67, %c0_68], %284 {strides = array<i32>} : memref<1x8x256xf32, #tpu.memory_space<vmem>>, vector<1x8x256xf32>,
    return
  }
  func.func @transform_0(%arg0: i32, %arg1: i32) -> (i32, i32, i32) {
    %c0_i32 = arith.constant 0 : i32
    %c0_i32_0 = arith.constant 0 : i32
    return %arg0, %c0_i32, %arg1 : i32, i32, i32
  }
  func.func @transform_1(%arg0: i32, %arg1: i32) -> (i32, i32) {
    %c0_i32 = arith.constant 0 : i32
    %c0_i32_0 = arith.constant 0 : i32
    %c0_i32_1 = arith.constant 0 : i32
    return %c0_i32, %c0_i32_0 : i32, i32
  }
  func.func @transform_2(%arg0: i32, %arg1: i32) -> (i32, i32, i32) {
    %c0_i32 = arith.constant 0 : i32
    %c0_i32_0 = arith.constant 0 : i32
    return %arg0, %c0_i32, %arg1 : i32, i32, i32
  }
}

</mosaic_0001>

<llo_original>
// kernel: tpu_custom_call.1
$region0: #{tpu_custom_call.1}
  #allocation0 [shape = 'u32[]', space=smem, size = 0x4, offset = 0x4, fixed_abs, tag = 'smem constant byte address 0x4 - core index']
  #allocation1 [shape = 'u32[144,128]{1,0:T(1,128)}', space=vmem, size = 0x12000, scoped, tag = 'internal scratch']
  #allocation2 [shape = 'f32[32,256]{1,0:T(8,128)}', space=vmem, size = 0x8000, scoped, tag = 'scratch operand']
  %s0 = inlined_call_operand.hbm [shape: f32[2,8,256], index: 0, kind: input, shape index: {}]
  %s1 = inlined_call_operand.hbm [shape: bf16[8,32], index: 1, kind: input, shape index: {}]
  %s2 = inlined_call_operand.hbm [shape: f32[2,8,256], index: 2, kind: output, shape index: {}]
  %s3 = sld [smem:[#allocation0]]
  $region49: #{tpu_custom_call.1} parent=0
    _
  %s5 = ssub.s32 1, %s3
  %s6 = scalar_select 0, %s5, %s3
  $region1: #{tpu_custom_call.1} parent=0
    #allocation3 [shape = 'u8[16384]{0}', space=vmem, size = 0x4000, scoped, tag = 'input window, operand 0']
    #allocation4 [shape = 's32[2]{0}', space=sflag, size = 0x8, scoped, tag = 'scoped memory for tpu_custom_call.1']
    #allocation5 [shape = 's32[2]{0}', space=sflag, size = 0x8, scoped, tag = 'scoped memory for tpu_custom_call.1']
    #allocation6 [shape = 'u8[2048]{0}', space=vmem, size = 0x800, scoped, tag = 'input window, operand 1, single buffered']
    #allocation7 [shape = 's32[1]{0}', space=sflag, size = 0x4, scoped, tag = 'scoped memory for tpu_custom_call.1']
    #allocation8 [shape = 'u8[16384]{0}', space=vmem, size = 0x4000, scoped, tag = 'output window, operand 0']
    %7 = vsyncpa [#allocation4], 0
    %s8 = scalar_lea.sflag [#allocation4], 1
    %9 = vsyncpa %s8, 0
    %10 = vsyncpa [#allocation7], 0
    %11 = vsyncpa [#allocation5], 0
    %s12 = scalar_lea.sflag [#allocation5], 1
    %13 = vsyncpa %s12, 0
    loop: start=0, step=1, limit=4
    $region2: #{tpu_custom_call.1} parent=1 // loop_pre_header
      _
    $region3: #{tpu_custom_call.1} parent=1 // loop_header
      %s15 = sphi 0, %s19
      %p16 = scmp.ge.s32.totalorder %s15, 4
      %s22 = sphi 0, %s34
      %s23 = sphi 0, %s30
      %s24 = sphi 0, %s22
      %s25 = sphi 0, %s23
      %s26 = sphi 0, %s24
      %s27 = sphi 0, %s25
      %s39 = sphi 0, %s41
      %s42 = sphi 0, %s39
      %s43 = sphi 0, %s42
      %s59 = sphi 0, %s43
      %s63 = sphi 0, %s63
      %s65 = sphi 0, %s63
      %s66 = sphi 0, %s65
      %s80 = sphi 0, %s66
      %s88 = sphi 0, %s90
      %s91 = sphi 0, %s88
      %s92 = sphi 0, %s91
      %s108 = sphi 0, %s92
    $region4: #{tpu_custom_call.1} parent=1 // loop_header_branch
      %18 = sbr.rel (%p16) target = $region8
    $region5: #{tpu_custom_call.1} parent=1 // loop_body
      %s20 = ssub.s32 %s15, 1
      %s21 = ssub.s32 %s15, 2
      %s28 = sadd.s32 1, %s23
      %p29 = scmp.ge.s32.totalorder %s28, 1
      %s30 = scalar_select %p29, 0, %s28
      %s31 = sadd.s32 1, %s22
      %s32 = scalar_select %p29, %s31, %s22
      %p33 = scmp.ge.s32.totalorder %s32, 2
      %s34 = scalar_select %p33, 0, %s32
      %s35 = ssub.s32 %s22, %s34
      %s36 = ssub.s32 %s23, %s30
      %s37 = sor.u32 %s35, %s36
      %p38 = scmp.eq.s32.totalorder %s37, 0
      %s40 = sadd.s32 %s39, 1
      %s41 = scalar_select %p38, %s39, %s40
      %p44 = pneg %p38
      %p45 = scmp.eq.s32.totalorder %s15, 1
      %p46 = por %p44, %p45
      %p47 = scmp.ne.s32.totalorder %s39, %s42
      %p48 = scmp.eq.s32.totalorder %s15, 0
      %p49 = por %p47, %p48
      %p50 = scmp.ne.s32.totalorder %s39, %s42
      %p51 = scmp.eq.s32.totalorder %s20, 1
      %p52 = por %p50, %p51
      %p53 = scmp.ne.s32.totalorder %s42, %s43
      %p54 = scmp.eq.s32.totalorder %s20, 0
      %p55 = por %p53, %p54
      %p56 = scmp.ne.s32.totalorder %s42, %s43
      %p57 = scmp.eq.s32.totalorder %s21, 1
      %p58 = por %p56, %p57
      %p60 = scmp.ne.s32.totalorder %s43, %s59
      %p61 = scmp.eq.s32.totalorder %s21, 0
      %p62 = por %p60, %p61
      %s64 = sadd.s32 %s63, 1
      %p67 = scmp.eq.s32.totalorder %s15, 1
      %p68 = scmp.ne.s32.totalorder %s63, %s65
      %p69 = scmp.eq.s32.totalorder %s15, 0
      %p70 = por %p68, %p69
      %p71 = scmp.ne.s32.totalorder %s63, %s65
      %p72 = scmp.eq.s32.totalorder %s20, 1
      %p73 = por %p71, %p72
      %p74 = scmp.ne.s32.totalorder %s65, %s66
      %p75 = scmp.eq.s32.totalorder %s20, 0
      %p76 = por %p74, %p75
      %p77 = scmp.ne.s32.totalorder %s65, %s66
      %p78 = scmp.eq.s32.totalorder %s21, 1
      %p79 = por %p77, %p78
      %p81 = scmp.ne.s32.totalorder %s66, %s80
      %p82 = scmp.eq.s32.totalorder %s21, 0
      %p83 = por %p81, %p82
      %s84 = ssub.s32 %s22, %s34
      %s85 = ssub.s32 %s23, %s30
      %s86 = sor.u32 %s84, %s85
      %p87 = scmp.eq.s32.totalorder %s86, 0
      %s89 = sadd.s32 %s88, 1
      %s90 = scalar_select %p87, %s88, %s89
      %p93 = pneg %p87
      %p94 = scmp.eq.s32.totalorder %s15, 1
      %p95 = por %p93, %p94
      %p96 = scmp.ne.s32.totalorder %s88, %s91
      %p97 = scmp.eq.s32.totalorder %s15, 0
      %p98 = por %p96, %p97
      %p99 = scmp.ne.s32.totalorder %s88, %s91
      %p100 = scmp.eq.s32.totalorder %s20, 1
      %p101 = por %p99, %p100
      %p102 = scmp.ne.s32.totalorder %s91, %s92
      %p103 = scmp.eq.s32.totalorder %s20, 0
      %p104 = por %p102, %p103
      %p105 = scmp.ne.s32.totalorder %s91, %s92
      %p106 = scmp.eq.s32.totalorder %s21, 1
      %p107 = por %p105, %p106
      %p109 = scmp.ne.s32.totalorder %s92, %s108
      %p110 = scmp.eq.s32.totalorder %s21, 0
      %p111 = por %p109, %p110
      %p112 = scmp.le.s32.totalorder 1, %s15
      %p113 = scmp.lt.s32.totalorder %s15, 3
      %p114 = pnand %p112, %p113
      %p115 = pneg %p114
      // Predicated region
      $region9: #{tpu_custom_call.1} parent=5 // pred_check
        _
      $region10: #{tpu_custom_call.1} parent=5 // pred_check_branch
        %117 = sbr.rel (%p114) target = $region12
      $region11: #{tpu_custom_call.1} parent=5 // pred_region
        %s118 = ssub.s32 %s15, 1
        // Predicated region
        $region13: #{tpu_custom_call.1} parent=11 // pred_check
          %p119 = pneg %p76
        $region14: #{tpu_custom_call.1} parent=11 // pred_check_branch
          %121 = sbr.rel (%p119) target = $region16
        $region15: #{tpu_custom_call.1} parent=11 // pred_region
          %s123 = ssub.s32 64, 64
          %124 = vsyncadd [#allocation7], %s123
          %s126 = sshll.u32 [#allocation6], 4
          %s127 = int_to_ptr.vmem [resolvable:$true] %s126
          %129 = dma.hbm_to_vmem [thread:$0]  %s1, 64, %s127, [#allocation7]
        $region16: #{tpu_custom_call.1} parent=11 // pred_fallthru
          _
      $region12: #{tpu_custom_call.1} parent=5 // pred_fallthru
        _
      %p130 = scmp.lt.s32.totalorder %s15, 2
      // Predicated region
      $region17: #{tpu_custom_call.1} parent=5 // pred_check
        %p131 = pneg %p130
      $region18: #{tpu_custom_call.1} parent=5 // pred_check_branch
        %133 = sbr.rel (%p131) target = $region20
      $region19: #{tpu_custom_call.1} parent=5 // pred_region
        // Predicated region
        $region21: #{tpu_custom_call.1} parent=19 // pred_check
          %p134 = pneg %p49
        $region22: #{tpu_custom_call.1} parent=19 // pred_check_branch
          %136 = sbr.rel (%p134) target = $region24
        $region23: #{tpu_custom_call.1} parent=19 // pred_region
          %s137 = sand.u32 %s39, 1
          %s138 = scalar_lea.sflag [#allocation4], %s137
          %s139 = sand.u32 %s39, 1
          %s140 = smul.addr %s139, 16
          %s141 = scalar_lea.vmem [#allocation3], %s140
          %s142 = smul.u32 2, %s23
          %s144 = ssub.s32 256, 256
          %145 = vsyncadd %s138, %s144
          %s146 = smul.addr %s22, 2
          %s147 = sadd.s32 %s142, %s146
          %s148 = smul.addr %s147, 128
          %s149 = scalar_lea.hbm %s0, %s148
          %s151 = sshll.u32 %s141, 4
          %s152 = int_to_ptr.vmem [resolvable:$true] %s151
          %154 = dma.hbm_to_vmem [thread:$0]  %s149, 256, %s152, %s138
        $region24: #{tpu_custom_call.1} parent=19 // pred_fallthru
          _
      $region20: #{tpu_custom_call.1} parent=5 // pred_fallthru
        _
      %p155 = scmp.le.s32.totalorder 1, %s15
      %p156 = scmp.lt.s32.totalorder %s15, 3
      %p157 = pnand %p155, %p156
      %p158 = pneg %p157
      // Predicated region
      $region25: #{tpu_custom_call.1} parent=5 // pred_check
        _
      $region26: #{tpu_custom_call.1} parent=5 // pred_check_branch
        %160 = sbr.rel (%p157) target = $region28
      $region27: #{tpu_custom_call.1} parent=5 // pred_region
        %s161 = ssub.s32 %s15, 1
        %s162 = sand.u32 %s42, 1
        %s163 = scalar_lea.sflag [#allocation4], %s162
        %s164 = sand.u32 %s42, 1
        %s165 = smul.addr %s164, 16
        %s166 = scalar_lea.vmem [#allocation3], %s165
        // Predicated region
        $region29: #{tpu_custom_call.1} parent=27 // pred_check
          %p167 = pneg %p55
        $region30: #{tpu_custom_call.1} parent=27 // pred_check_branch
          %169 = sbr.rel (%p167) target = $region32
        $region31: #{tpu_custom_call.1} parent=27 // pred_region
          %170 = dma.done %s163, 256
        $region32: #{tpu_custom_call.1} parent=27 // pred_fallthru
          _
        // Predicated region
        $region33: #{tpu_custom_call.1} parent=27 // pred_check
          %p171 = pneg %p76
        $region34: #{tpu_custom_call.1} parent=27 // pred_check_branch
          %173 = sbr.rel (%p171) target = $region36
        $region35: #{tpu_custom_call.1} parent=27 // pred_region
          %174 = dma.done [#allocation7], 64
        $region36: #{tpu_custom_call.1} parent=27 // pred_fallthru
          _
        %s175 = sand.u32 %s42, 1
        %s176 = scalar_lea.sflag [#allocation4], %s175
        %s177 = sand.u32 %s42, 1
        %s178 = smul.addr %s177, 16
        %s179 = scalar_lea.vmem [#allocation3], %s178
        %p180 = pneg %p55
        %p181 = pneg %p52
        %p182 = pneg %p76
        %p183 = pneg %p73
        %p184 = pneg %p104
        %p185 = pneg %p101
        %s186 = sand.u32 %s91, 1
        %s187 = scalar_lea.sflag [#allocation5], %s186
        %s188 = sand.u32 %s91, 1
        %s189 = smul.addr %s188, 16
        %s190 = scalar_lea.vmem [#allocation8], %s189
        %s191 = smul.u32 2, %s25
        %s192 = smul.u32 2, %s25
        %v194 = vlaneseq
        %v195 = vshrl.u32 %v194, 7
        %v196 = vadd.s32 %v195, 8
        %v197 = vsub.s32 3, %v195
        %v198 = vshll.u32 1, %v197
        %v199 = vand.u32 %v195, 1
        %vm200 = vcmp.eq.s32.totalorder %v199, 1
        %v201 = vshra.s32 %v195, 1
        %v202 = vand.u32 %v201, 1
        %vm203 = vcmp.eq.s32.totalorder %v202, 1
        %v204 = vld [vmem:[%s166] sm:$0xf]
        %v205 = vld [vmem:[%s166 + $0x8] sm:$0xf]
        %v206 = vcvt.f32.s32.ties.to.even %v204
        %v207 = vcvt.f32.s32.ties.to.even %v205
        %v208 = vmul.u32 %v206, %v198
        %v209 = vmul.u32 %v207, %v198
        %vm210 = vcmask 1043456
        %v211 = vsel %vm210, %v208, 0
        %v212 = vrot.slane %v211, 4
        %v213 = vadd.s32 %v211, %v212
        %v214 = vrot.slane %v213, 2
        %v215 = vadd.s32 %v213, %v214
        %v216 = vrot.slane %v215, 1
        %v217 = vadd.s32 %v215, %v216
        %v218 = vsel %vm210, %v209, 0
        %v219 = vrot.slane %v218, 4
        %v220 = vadd.s32 %v218, %v219
        %v221 = vrot.slane %v220, 2
        %v222 = vadd.s32 %v220, %v221
        %v223 = vrot.slane %v222, 1
        %v224 = vadd.s32 %v222, %v223
        %v225 = vsub.f32 %v204, 0.5
        %v226 = vsub.f32 %v205, 0.5
        %v227 = vand.u32 2147483647, %v225
        %v228 = vand.u32 2147483647, %v226
        %v229 = vsel %vm210, %v227, inf
        %v230 = vrot.slane %v229, 4
        %v231 = vmin.f32 %v229, %v230
        %v232 = vrot.slane %v231, 2
        %v233 = vmin.f32 %v231, %v232
        %v234 = vrot.slane %v233, 1
        %v235 = vmin.f32 %v233, %v234
        %v236 = vsel %vm210, %v228, inf
        %v237 = vrot.slane %v236, 4
        %v238 = vmin.f32 %v236, %v237
        %v239 = vrot.slane %v238, 2
        %v240 = vmin.f32 %v238, %v239
        %v241 = vrot.slane %v240, 1
        %v242 = vmin.f32 %v240, %v241
        %vm243 = vcmp.eq.f32.partialorder %v227, %v235
        %vm244 = vcmp.eq.f32.partialorder %v228, %v242
        %v245 = vsel %vm243, %v195, 4
        %v246 = vsel %vm244, %v195, 4
        %v247 = vsel %vm210, %v245, 2147483647
        %v248 = vrot.slane %v247, 4
        %vm249 = vcmp.lt.s32.totalorder %v247, %v248
        %v250 = vsel %vm249, %v247, %v248
        %v251 = vrot.slane %v250, 2
        %vm252 = vcmp.lt.s32.totalorder %v250, %v251
        %v253 = vsel %vm252, %v250, %v251
        %v254 = vrot.slane %v253, 1
        %vm255 = vcmp.lt.s32.totalorder %v253, %v254
        %v256 = vsel %vm255, %v253, %v254
        %v257 = vsel %vm210, %v246, 2147483647
        %v258 = vrot.slane %v257, 4
        %vm259 = vcmp.lt.s32.totalorder %v257, %v258
        %v260 = vsel %vm259, %v257, %v258
        %v261 = vrot.slane %v260, 2
        %vm262 = vcmp.lt.s32.totalorder %v260, %v261
        %v263 = vsel %vm262, %v260, %v261
        %v264 = vrot.slane %v263, 1
        %vm265 = vcmp.lt.s32.totalorder %v263, %v264
        %v266 = vsel %vm265, %v263, %v264
        %vm267 = vcmp.eq.s32.totalorder %v195, %v256
        %vm268 = vcmp.eq.s32.totalorder %v195, %v266
        %v269 = vsel %vm267, %v204, 0.0
        %v270 = vsel %vm268, %v205, 0.0
        %v271 = vsel %vm210, %v269, 0.0
        %v272 = vrot.slane %v271, 4
        %v273 = vadd.f32 %v271, %v272
        %v274 = vrot.slane %v273, 2
        %v275 = vadd.f32 %v273, %v274
        %v276 = vrot.slane %v275, 1
        %v277 = vadd.f32 %v275, %v276
        %v278 = vsel %vm210, %v270, 0.0
        %v279 = vrot.slane %v278, 4
        %v280 = vadd.f32 %v278, %v279
        %v281 = vrot.slane %v280, 2
        %v282 = vadd.f32 %v280, %v281
        %v283 = vrot.slane %v282, 1
        %v284 = vadd.f32 %v282, %v283
        %v285 = vsel %vm267, 1, 0
        %v286 = vsel %vm268, 1, 0
        %v287 = vcvt.s32.f32 %v285
        %v288 = vcvt.s32.f32 %v286
        %v289 = vadd.f32 %v227, %v287
        %v290 = vadd.f32 %v228, %v288
        %v291 = vsub.s32 3, %v256
        %v292 = vsub.s32 3, %v266
        %v293 = vshll.u32 1, %v291
        %v294 = vshll.u32 1, %v292
        %v295 = vor.u32 %v217, %v293
        %v296 = vor.u32 %v224, %v294
        %v297 = vxor.u32 %v293, 15
        %v298 = vxor.u32 %v294, 15
        %v299 = vand.u32 %v217, %v297
        %v300 = vand.u32 %v224, %v298
        %v301 = vsel %vm200, 1, 0
        %vm302 = vcmp.eq.s32.totalorder %v301, 1
        %v303 = vsel %vm302, %v295, %v299
        %v304 = vsel %vm302, %v296, %v300
        %v305 = vsub.f32 1.0, %v277
        %v306 = vsub.f32 1.0, %v284
        %v307 = vsel %vm302, %v277, %v305
        %v308 = vsel %vm302, %v284, %v306
        %v309 = vsel %vm210, %v289, inf
        %v310 = vrot.slane %v309, 4
        %v311 = vmin.f32 %v309, %v310
        %v312 = vrot.slane %v311, 2
        %v313 = vmin.f32 %v311, %v312
        %v314 = vrot.slane %v313, 1
        %v315 = vmin.f32 %v313, %v314
        %v316 = vsel %vm210, %v290, inf
        %v317 = vrot.slane %v316, 4
        %v318 = vmin.f32 %v316, %v317
        %v319 = vrot.slane %v318, 2
        %v320 = vmin.f32 %v318, %v319
        %v321 = vrot.slane %v320, 1
        %v322 = vmin.f32 %v320, %v321
        %vm323 = vcmp.eq.f32.partialorder %v289, %v315
        %vm324 = vcmp.eq.f32.partialorder %v290, %v322
        %v325 = vsel %vm323, %v195, 4
        %v326 = vsel %vm324, %v195, 4
        %v327 = vsel %vm210, %v325, 2147483647
        %v328 = vrot.slane %v327, 4
        %vm329 = vcmp.lt.s32.totalorder %v327, %v328
        %v330 = vsel %vm329, %v327, %v328
        %v331 = vrot.slane %v330, 2
        %vm332 = vcmp.lt.s32.totalorder %v330, %v331
        %v333 = vsel %vm332, %v330, %v331
        %v334 = vrot.slane %v333, 1
        %vm335 = vcmp.lt.s32.totalorder %v333, %v334
        %v336 = vsel %vm335, %v333, %v334
        %v337 = vsel %vm210, %v326, 2147483647
        %v338 = vrot.slane %v337, 4
        %vm339 = vcmp.lt.s32.totalorder %v337, %v338
        %v340 = vsel %vm339, %v337, %v338
        %v341 = vrot.slane %v340, 2
        %vm342 = vcmp.lt.s32.totalorder %v340, %v341
        %v343 = vsel %vm342, %v340, %v341
        %v344 = vrot.slane %v343, 1
        %vm345 = vcmp.lt.s32.totalorder %v343, %v344
        %v346 = vsel %vm345, %v343, %v344
        %vm347 = vcmp.eq.s32.totalorder %v195, %v336
        %vm348 = vcmp.eq.s32.totalorder %v195, %v346
        %v349 = vsel %vm347, %v204, 0.0
        %v350 = vsel %vm348, %v205, 0.0
        %v351 = vsel %vm210, %v349, 0.0
        %v352 = vrot.slane %v351, 4
        %v353 = vadd.f32 %v351, %v352
        %v354 = vrot.slane %v353, 2
        %v355 = vadd.f32 %v353, %v354
        %v356 = vrot.slane %v355, 1
        %v357 = vadd.f32 %v355, %v356
        %v358 = vsel %vm210, %v350, 0.0
        %v359 = vrot.slane %v358, 4
        %v360 = vadd.f32 %v358, %v359
        %v361 = vrot.slane %v360, 2
        %v362 = vadd.f32 %v360, %v361
        %v363 = vrot.slane %v362, 1
        %v364 = vadd.f32 %v362, %v363
        %v365 = vsub.s32 3, %v336
        %v366 = vsub.s32 3, %v346
        %v367 = vshll.u32 1, %v365
        %v368 = vshll.u32 1, %v366
        %v369 = vor.u32 %v303, %v367
        %v370 = vor.u32 %v304, %v368
        %v371 = vxor.u32 %v367, 15
        %v372 = vxor.u32 %v368, 15
        %v373 = vand.u32 %v303, %v371
        %v374 = vand.u32 %v304, %v372
        %v375 = vsel %vm203, 1, 0
        %vm376 = vcmp.eq.s32.totalorder %v375, 1
        %v377 = vsel %vm376, %v369, %v373
        %v378 = vsel %vm376, %v370, %v374
        %v379 = vsub.f32 1.0, %v357
        %v380 = vsub.f32 1.0, %v364
        %v381 = vsel %vm376, %v357, %v379
        %v382 = vsel %vm376, %v364, %v380
        %v383 = vmul.f32 %v307, %v381
        %v384 = vmul.f32 %v308, %v382
        %v385 = vlaneseq
        %v386 = vshrl.u32 %v385, 7
        %v387 = vsub.s32 0, %v386
        %v388 = vrot.slane %v377, %v387
        %v389 = vlaneseq
        %v390 = vshrl.u32 %v389, 7
        %v391 = vsub.s32 0, %v390
        %v392 = vrot.slane %v378, %v391
        %vm393 = vcmp.eq.s32.totalorder %v195, %v388
        %vm394 = vcmp.eq.s32.totalorder %v195, %v392
        %vm395 = vcmp.eq.s32.totalorder %v196, %v388
        %vm396 = vcmp.eq.s32.totalorder %v196, %v392
        %v397 = vlaneseq
        %v398 = vshrl.u32 %v397, 7
        %v399 = vsub.s32 0, %v398
        %v400 = vrot.slane %v383, %v399
        %v401 = vlaneseq
        %v402 = vshrl.u32 %v401, 7
        %v403 = vsub.s32 0, %v402
        %v404 = vrot.slane %v384, %v403
        %v405 = vsel %vm393, %v400, 0.0
        %v406 = vsel %vm394, %v404, 0.0
        %v407 = vsel %vm395, %v400, 0.0
        %v408 = vsel %vm396, %v404, 0.0
        %v409 = vadd.f32 %v405, 0.0
        %v410 = vadd.f32 %v406, 0.0
        %v411 = vadd.f32 %v407, 0.0
        %v412 = vadd.f32 %v408, 0.0
        %v413 = vlaneseq
        %v414 = vshrl.u32 %v413, 7
        %v415 = vsub.s32 1, %v414
        %v416 = vrot.slane %v377, %v415
        %v417 = vlaneseq
        %v418 = vshrl.u32 %v417, 7
        %v419 = vsub.s32 1, %v418
        %v420 = vrot.slane %v378, %v419
        %vm421 = vcmp.eq.s32.totalorder %v195, %v416
        %vm422 = vcmp.eq.s32.totalorder %v195, %v420
        %vm423 = vcmp.eq.s32.totalorder %v196, %v416
        %vm424 = vcmp.eq.s32.totalorder %v196, %v420
        %v425 = vlaneseq
        %v426 = vshrl.u32 %v425, 7
        %v427 = vsub.s32 1, %v426
        %v428 = vrot.slane %v383, %v427
        %v429 = vlaneseq
        %v430 = vshrl.u32 %v429, 7
        %v431 = vsub.s32 1, %v430
        %v432 = vrot.slane %v384, %v431
        %v433 = vsel %vm421, %v428, 0.0
        %v434 = vsel %vm422, %v432, 0.0
        %v435 = vsel %vm423, %v428, 0.0
        %v436 = vsel %vm424, %v432, 0.0
        %v437 = vadd.f32 %v409, %v433
        %v438 = vadd.f32 %v410, %v434
        %v439 = vadd.f32 %v411, %v435
        %v440 = vadd.f32 %v412, %v436
        %v441 = vlaneseq
        %v442 = vshrl.u32 %v441, 7
        %v443 = vsub.s32 2, %v442
        %v444 = vrot.slane %v377, %v443
        %v445 = vlaneseq
        %v446 = vshrl.u32 %v445, 7
        %v447 = vsub.s32 2, %v446
        %v448 = vrot.slane %v378, %v447
        %vm449 = vcmp.eq.s32.totalorder %v195, %v444
        %vm450 = vcmp.eq.s32.totalorder %v195, %v448
        %vm451 = vcmp.eq.s32.totalorder %v196, %v444
        %vm452 = vcmp.eq.s32.totalorder %v196, %v448
        %v453 = vlaneseq
        %v454 = vshrl.u32 %v453, 7
        %v455 = vsub.s32 2, %v454
        %v456 = vrot.slane %v383, %v455
        %v457 = vlaneseq
        %v458 = vshrl.u32 %v457, 7
        %v459 = vsub.s32 2, %v458
        %v460 = vrot.slane %v384, %v459
        %v461 = vsel %vm449, %v456, 0.0
        %v462 = vsel %vm450, %v460, 0.0
        %v463 = vsel %vm451, %v456, 0.0
        %v464 = vsel %vm452, %v460, 0.0
        %v465 = vadd.f32 %v437, %v461
        %v466 = vadd.f32 %v438, %v462
        %v467 = vadd.f32 %v439, %v463
        %v468 = vadd.f32 %v440, %v464
        %v469 = vlaneseq
        %v470 = vshrl.u32 %v469, 7
        %v471 = vsub.s32 3, %v470
        %v472 = vrot.slane %v377, %v471
        %v473 = vlaneseq
        %v474 = vshrl.u32 %v473, 7
        %v475 = vsub.s32 3, %v474
        %v476 = vrot.slane %v378, %v475
        %vm477 = vcmp.eq.s32.totalorder %v195, %v472
        %vm478 = vcmp.eq.s32.totalorder %v195, %v476
        %vm479 = vcmp.eq.s32.totalorder %v196, %v472
        %vm480 = vcmp.eq.s32.totalorder %v196, %v476
        %v481 = vlaneseq
        %v482 = vshrl.u32 %v481, 7
        %v483 = vsub.s32 3, %v482
        %v484 = vrot.slane %v383, %v483
        %v485 = vlaneseq
        %v486 = vshrl.u32 %v485, 7
        %v487 = vsub.s32 3, %v486
        %v488 = vrot.slane %v384, %v487
        %v489 = vsel %vm477, %v484, 0.0
        %v490 = vsel %vm478, %v488, 0.0
        %v491 = vsel %vm479, %v484, 0.0
        %v492 = vsel %vm480, %v488, 0.0
        %v493 = vadd.f32 %v465, %v489
        %v494 = vadd.f32 %v466, %v490
        %v495 = vadd.f32 %v467, %v491
        %v496 = vadd.f32 %v468, %v492
        %497 = vst [vmem:[#allocation2] sm:$0xff] %v493
        %498 = vst [vmem:[#allocation2 + $0x8] sm:$0xff] %v494
        %499 = vst [vmem:[#allocation2 + $0x10] sm:$0xff] %v495
        %500 = vst [vmem:[#allocation2 + $0x18] sm:$0xff] %v496
        %v501 = vld [vmem:[%s166] sm:$0xf0]
        %v502 = vld [vmem:[%s166 + $0x8] sm:$0xf0]
        %v503 = vcvt.f32.s32.ties.to.even %v501
        %v504 = vcvt.f32.s32.ties.to.even %v502
        %v505 = vrot.slane %v198, 4
        %v506 = vmul.u32 %v503, %v505
        %v507 = vmul.u32 %v504, %v505
        %vm508 = vcmask 1047556
        %v509 = vsel %vm508, %v506, 0
        %v510 = vrot.slane %v509, 4
        %v511 = vadd.s32 %v509, %v510
        %v512 = vrot.slane %v511, 2
        %v513 = vadd.s32 %v511, %v512
        %v514 = vrot.slane %v513, 1
        %v515 = vadd.s32 %v513, %v514
        %v516 = vsel %vm508, %v507, 0
        %v517 = vrot.slane %v516, 4
        %v518 = vadd.s32 %v516, %v517
        %v519 = vrot.slane %v518, 2
        %v520 = vadd.s32 %v518, %v519
        %v521 = vrot.slane %v520, 1
        %v522 = vadd.s32 %v520, %v521
        %v523 = vsub.f32 %v501, 0.5
        %v524 = vsub.f32 %v502, 0.5
        %v525 = vand.u32 2147483647, %v523
        %v526 = vand.u32 2147483647, %v524
        %v527 = vsel %vm508, %v525, inf
        %v528 = vrot.slane %v527, 4
        %v529 = vmin.f32 %v527, %v528
        %v530 = vrot.slane %v529, 2
        %v531 = vmin.f32 %v529, %v530
        %v532 = vrot.slane %v531, 1
        %v533 = vmin.f32 %v531, %v532
        %v534 = vsel %vm508, %v526, inf
        %v535 = vrot.slane %v534, 4
        %v536 = vmin.f32 %v534, %v535
        %v537 = vrot.slane %v536, 2
        %v538 = vmin.f32 %v536, %v537
        %v539 = vrot.slane %v538, 1
        %v540 = vmin.f32 %v538, %v539
        %vm541 = vcmp.eq.f32.partialorder %v525, %v533
        %vm542 = vcmp.eq.f32.partialorder %v526, %v540
        %v543 = vrot.slane %v195, 4
        %v544 = vsel %vm541, %v543, 4
        %v545 = vsel %vm542, %v543, 4
        %v546 = vsel %vm508, %v544, 2147483647
        %v547 = vrot.slane %v546, 4
        %vm548 = vcmp.lt.s32.totalorder %v546, %v547
        %v549 = vsel %vm548, %v546, %v547
        %v550 = vrot.slane %v549, 2
        %vm551 = vcmp.lt.s32.totalorder %v549, %v550
        %v552 = vsel %vm551, %v549, %v550
        %v553 = vrot.slane %v552, 1
        %vm554 = vcmp.lt.s32.totalorder %v552, %v553
        %v555 = vsel %vm554, %v552, %v553
        %v556 = vsel %vm508, %v545, 2147483647
        %v557 = vrot.slane %v556, 4
        %vm558 = vcmp.lt.s32.totalorder %v556, %v557
        %v559 = vsel %vm558, %v556, %v557
        %v560 = vrot.slane %v559, 2
        %vm561 = vcmp.lt.s32.totalorder %v559, %v560
        %v562 = vsel %vm561, %v559, %v560
        %v563 = vrot.slane %v562, 1
        %vm564 = vcmp.lt.s32.totalorder %v562, %v563
        %v565 = vsel %vm564, %v562, %v563
        %vm566 = vcmp.eq.s32.totalorder %v195, %v555
        %vm567 = vcmp.eq.s32.totalorder %v195, %v565
        %v570 = vrot.slane %v501, 4
        %v571 = vrot.slane %v502, 4
        %v574 = vsel %vm566, %v570, 0.0
        %v575 = vsel %vm567, %v571, 0.0
        %v576 = vsel %vm210, %v574, 0.0
        %v577 = vrot.slane %v576, 4
        %v578 = vadd.f32 %v576, %v577
        %v579 = vrot.slane %v578, 2
        %v580 = vadd.f32 %v578, %v579
        %v581 = vrot.slane %v580, 1
        %v582 = vadd.f32 %v580, %v581
        %v583 = vsel %vm210, %v575, 0.0
        %v584 = vrot.slane %v583, 4
        %v585 = vadd.f32 %v583, %v584
        %v586 = vrot.slane %v585, 2
        %v587 = vadd.f32 %v585, %v586
        %v588 = vrot.slane %v587, 1
        %v589 = vadd.f32 %v587, %v588
        %v590 = vsel %vm566, 1, 0
        %v591 = vsel %vm567, 1, 0
        %v592 = vcvt.s32.f32 %v590
        %v593 = vcvt.s32.f32 %v591
        %v596 = vrot.slane %v592, 4
        %v597 = vrot.slane %v593, 4
        %v600 = vadd.f32 %v525, %v596
        %v601 = vadd.f32 %v526, %v597
        %v602 = vsub.s32 3, %v555
        %v603 = vsub.s32 3, %v565
        %v604 = vshll.u32 1, %v602
        %v605 = vshll.u32 1, %v603
        %v606 = vor.u32 %v515, %v604
        %v607 = vor.u32 %v522, %v605
        %v608 = vxor.u32 %v604, 15
        %v609 = vxor.u32 %v605, 15
        %v610 = vand.u32 %v515, %v608
        %v611 = vand.u32 %v522, %v609
        %v612 = vsel %vm302, %v606, %v610
        %v613 = vsel %vm302, %v607, %v611
        %v614 = vsub.f32 1.0, %v582
        %v615 = vsub.f32 1.0, %v589
        %v616 = vsel %vm302, %v582, %v614
        %v617 = vsel %vm302, %v589, %v615
        %v618 = vsel %vm508, %v600, inf
        %v619 = vrot.slane %v618, 4
        %v620 = vmin.f32 %v618, %v619
        %v621 = vrot.slane %v620, 2
        %v622 = vmin.f32 %v620, %v621
        %v623 = vrot.slane %v622, 1
        %v624 = vmin.f32 %v622, %v623
        %v625 = vsel %vm508, %v601, inf
        %v626 = vrot.slane %v625, 4
        %v627 = vmin.f32 %v625, %v626
        %v628 = vrot.slane %v627, 2
        %v629 = vmin.f32 %v627, %v628
        %v630 = vrot.slane %v629, 1
        %v631 = vmin.f32 %v629, %v630
        %vm632 = vcmp.eq.f32.partialorder %v600, %v624
        %vm633 = vcmp.eq.f32.partialorder %v601, %v631
        %v634 = vsel %vm632, %v543, 4
        %v635 = vsel %vm633, %v543, 4
        %v636 = vsel %vm508, %v634, 2147483647
        %v637 = vrot.slane %v636, 4
        %vm638 = vcmp.lt.s32.totalorder %v636, %v637
        %v639 = vsel %vm638, %v636, %v637
        %v640 = vrot.slane %v639, 2
        %vm641 = vcmp.lt.s32.totalorder %v639, %v640
        %v642 = vsel %vm641, %v639, %v640
        %v643 = vrot.slane %v642, 1
        %vm644 = vcmp.lt.s32.totalorder %v642, %v643
        %v645 = vsel %vm644, %v642, %v643
        %v646 = vsel %vm508, %v635, 2147483647
        %v647 = vrot.slane %v646, 4
        %vm648 = vcmp.lt.s32.totalorder %v646, %v647
        %v649 = vsel %vm648, %v646, %v647
        %v650 = vrot.slane %v649, 2
        %vm651 = vcmp.lt.s32.totalorder %v649, %v650
        %v652 = vsel %vm651, %v649, %v650
        %v653 = vrot.slane %v652, 1
        %vm654 = vcmp.lt.s32.totalorder %v652, %v653
        %v655 = vsel %vm654, %v652, %v653
        %vm656 = vcmp.eq.s32.totalorder %v195, %v645
        %vm657 = vcmp.eq.s32.totalorder %v195, %v655
        %v658 = vsel %vm656, %v570, 0.0
        %v659 = vsel %vm657, %v571, 0.0
        %v660 = vsel %vm210, %v658, 0.0
        %v661 = vrot.slane %v660, 4
        %v662 = vadd.f32 %v660, %v661
        %v663 = vrot.slane %v662, 2
        %v664 = vadd.f32 %v662, %v663
        %v665 = vrot.slane %v664, 1
        %v666 = vadd.f32 %v664, %v665
        %v667 = vsel %vm210, %v659, 0.0
        %v668 = vrot.slane %v667, 4
        %v669 = vadd.f32 %v667, %v668
        %v670 = vrot.slane %v669, 2
        %v671 = vadd.f32 %v669, %v670
        %v672 = vrot.slane %v671, 1
        %v673 = vadd.f32 %v671, %v672
        %v674 = vsub.s32 3, %v645
        %v675 = vsub.s32 3, %v655
        %v676 = vshll.u32 1, %v674
        %v677 = vshll.u32 1, %v675
        %v678 = vor.u32 %v612, %v676
        %v679 = vor.u32 %v613, %v677
        %v680 = vxor.u32 %v676, 15
        %v681 = vxor.u32 %v677, 15
        %v682 = vand.u32 %v612, %v680
        %v683 = vand.u32 %v613, %v681
        %v684 = vsel %vm376, %v678, %v682
        %v685 = vsel %vm376, %v679, %v683
        %v686 = vsub.f32 1.0, %v666
        %v687 = vsub.f32 1.0, %v673
        %v688 = vsel %vm376, %v666, %v686
        %v689 = vsel %vm376, %v673, %v687
        %v690 = vmul.f32 %v616, %v688
        %v691 = vmul.f32 %v617, %v689
        %v692 = vlaneseq
        %v693 = vshrl.u32 %v692, 7
        %v694 = vsub.s32 0, %v693
        %v695 = vrot.slane %v684, %v694
        %v696 = vlaneseq
        %v697 = vshrl.u32 %v696, 7
        %v698 = vsub.s32 0, %v697
        %v699 = vrot.slane %v685, %v698
        %vm700 = vcmp.eq.s32.totalorder %v195, %v695
        %vm701 = vcmp.eq.s32.totalorder %v195, %v699
        %vm702 = vcmp.eq.s32.totalorder %v196, %v695
        %vm703 = vcmp.eq.s32.totalorder %v196, %v699
        %v704 = vlaneseq
        %v705 = vshrl.u32 %v704, 7
        %v706 = vsub.s32 0, %v705
        %v707 = vrot.slane %v690, %v706
        %v708 = vlaneseq
        %v709 = vshrl.u32 %v708, 7
        %v710 = vsub.s32 0, %v709
        %v711 = vrot.slane %v691, %v710
        %v712 = vsel %vm700, %v707, 0.0
        %v713 = vsel %vm701, %v711, 0.0
        %v714 = vsel %vm702, %v707, 0.0
        %v715 = vsel %vm703, %v711, 0.0
        %v716 = vadd.f32 %v712, 0.0
        %v717 = vadd.f32 %v713, 0.0
        %v718 = vadd.f32 %v714, 0.0
        %v719 = vadd.f32 %v715, 0.0
        %v720 = vlaneseq
        %v721 = vshrl.u32 %v720, 7
        %v722 = vsub.s32 1, %v721
        %v723 = vrot.slane %v684, %v722
        %v724 = vlaneseq
        %v725 = vshrl.u32 %v724, 7
        %v726 = vsub.s32 1, %v725
        %v727 = vrot.slane %v685, %v726
        %vm728 = vcmp.eq.s32.totalorder %v195, %v723
        %vm729 = vcmp.eq.s32.totalorder %v195, %v727
        %vm730 = vcmp.eq.s32.totalorder %v196, %v723
        %vm731 = vcmp.eq.s32.totalorder %v196, %v727
        %v732 = vlaneseq
        %v733 = vshrl.u32 %v732, 7
        %v734 = vsub.s32 1, %v733
        %v735 = vrot.slane %v690, %v734
        %v736 = vlaneseq
        %v737 = vshrl.u32 %v736, 7
        %v738 = vsub.s32 1, %v737
        %v739 = vrot.slane %v691, %v738
        %v740 = vsel %vm728, %v735, 0.0
        %v741 = vsel %vm729, %v739, 0.0
        %v742 = vsel %vm730, %v735, 0.0
        %v743 = vsel %vm731, %v739, 0.0
        %v744 = vadd.f32 %v716, %v740
        %v745 = vadd.f32 %v717, %v741
        %v746 = vadd.f32 %v718, %v742
        %v747 = vadd.f32 %v719, %v743
        %v748 = vlaneseq
        %v749 = vshrl.u32 %v748, 7
        %v750 = vsub.s32 2, %v749
        %v751 = vrot.slane %v684, %v750
        %v752 = vlaneseq
        %v753 = vshrl.u32 %v752, 7
        %v754 = vsub.s32 2, %v753
        %v755 = vrot.slane %v685, %v754
        %vm756 = vcmp.eq.s32.totalorder %v195, %v751
        %vm757 = vcmp.eq.s32.totalorder %v195, %v755
        %vm758 = vcmp.eq.s32.totalorder %v196, %v751
        %vm759 = vcmp.eq.s32.totalorder %v196, %v755
        %v760 = vlaneseq
        %v761 = vshrl.u32 %v760, 7
        %v762 = vsub.s32 2, %v761
        %v763 = vrot.slane %v690, %v762
        %v764 = vlaneseq
        %v765 = vshrl.u32 %v764, 7
        %v766 = vsub.s32 2, %v765
        %v767 = vrot.slane %v691, %v766
        %v768 = vsel %vm756, %v763, 0.0
        %v769 = vsel %vm757, %v767, 0.0
        %v770 = vsel %vm758, %v763, 0.0
        %v771 = vsel %vm759, %v767, 0.0
        %v772 = vadd.f32 %v744, %v768
        %v773 = vadd.f32 %v745, %v769
        %v774 = vadd.f32 %v746, %v770
        %v775 = vadd.f32 %v747, %v771
        %v776 = vlaneseq
        %v777 = vshrl.u32 %v776, 7
        %v778 = vsub.s32 3, %v777
        %v779 = vrot.slane %v684, %v778
        %v780 = vlaneseq
        %v781 = vshrl.u32 %v780, 7
        %v782 = vsub.s32 3, %v781
        %v783 = vrot.slane %v685, %v782
        %vm784 = vcmp.eq.s32.totalorder %v195, %v779
        %vm785 = vcmp.eq.s32.totalorder %v195, %v783
        %vm786 = vcmp.eq.s32.totalorder %v196, %v779
        %vm787 = vcmp.eq.s32.totalorder %v196, %v783
        %v788 = vlaneseq
        %v789 = vshrl.u32 %v788, 7
        %v790 = vsub.s32 3, %v789
        %v791 = vrot.slane %v690, %v790
        %v792 = vlaneseq
        %v793 = vshrl.u32 %v792, 7
        %v794 = vsub.s32 3, %v793
        %v795 = vrot.slane %v691, %v794
        %v796 = vsel %vm784, %v791, 0.0
        %v797 = vsel %vm785, %v795, 0.0
        %v798 = vsel %vm786, %v791, 0.0
        %v799 = vsel %vm787, %v795, 0.0
        %v800 = vadd.f32 %v772, %v796
        %v801 = vadd.f32 %v773, %v797
        %v802 = vadd.f32 %v774, %v798
        %v803 = vadd.f32 %v775, %v799
        %804 = vst [vmem:[#allocation2 + $0x20] sm:$0xff] %v800
        %805 = vst [vmem:[#allocation2 + $0x28] sm:$0xff] %v801
        %806 = vst [vmem:[#allocation2 + $0x30] sm:$0xff] %v802
        %807 = vst [vmem:[#allocation2 + $0x38] sm:$0xff] %v803
        %v808 = vld [vmem:[#allocation6] sm:$0xf]
        %v809 = vld [vmem:[#allocation2] sm:$0xff]
        %v810 = vld [vmem:[#allocation2 + $0x8] sm:$0xff]
        %v811 = vld [vmem:[#allocation2 + $0x10] sm:$0xff]
        %v812 = vld [vmem:[#allocation2 + $0x18] sm:$0xff]
        %v813 = vld [vmem:[#allocation2 + $0x20] sm:$0xff]
        %v814 = vld [vmem:[#allocation2 + $0x28] sm:$0xff]
        %v815 = vld [vmem:[#allocation2 + $0x30] sm:$0xff]
        %v816 = vld [vmem:[#allocation2 + $0x38] sm:$0xff]
        %v817 = vpack.c.bf16 %v811, %v809
        %v818 = vpack.c.bf16 %v812, %v810
        %v819 = vpack.c.bf16 %v815, %v813
        %v820 = vpack.c.bf16 %v816, %v814
        %vm821 = vcmask 261120
        %v823 = vsel %vm821, %v808, 0
        %825 = vmatprep.subr.bf16.mxu0 %v818
        %826 = vmatpush1.bf16.msra.mxu0 %v817
        %827 = vmatprep.subr.bf16.mxu0 %v820
        %828 = vmatpush1.bf16.msra.mxu0 %v819
        %829 = vmatprep.subr.bf16.mxu0 0
        %830 = vmatpush1.bf16.msra.mxu0 0
        %831 = vmatprep.subr.bf16.mxu0 0
        %832 = vmatpush1.bf16.msra.mxu0 0
        %833 = vmatprep.subr.bf16.mxu0 0
        %834 = vmatpush1.bf16.msra.mxu0 0
        %835 = vmatprep.subr.bf16.mxu0 0
        %836 = vmatpush1.bf16.msra.mxu0 0
        %837 = vmatprep.subr.bf16.mxu0 0
        %838 = vmatpush1.bf16.msra.mxu0 0
        %839 = vmatprep.subr.bf16.mxu0 0
        %840 = vmatpush1.bf16.msra.mxu0 0
        %841 = vmatprep.subr.bf16.mxu0 0
        %842 = vmatpush1.bf16.msra.mxu0 0
        %843 = vmatprep.subr.bf16.mxu0 0
        %844 = vmatpush1.bf16.msra.mxu0 0
        %845 = vmatprep.subr.bf16.mxu0 0
        %846 = vmatpush1.bf16.msra.mxu0 0
        %847 = vmatprep.subr.bf16.mxu0 0
        %848 = vmatpush1.bf16.msra.mxu0 0
        %849 = vmatprep.subr.bf16.mxu0 0
        %850 = vmatpush1.bf16.msra.mxu0 0
        %851 = vmatprep.subr.bf16.mxu0 0
        %852 = vmatpush1.bf16.msra.mxu0 0
        %853 = vmatprep.subr.bf16.mxu0 0
        %854 = vmatpush1.bf16.msra.mxu0 0
        %855 = vmatprep.subr.bf16.mxu0 0
        %856 = vmatpush1.bf16.msra.mxu0 0
        %857 = vmatprep.mubr.bf16.mxu0 0
        %858 = vmatmul.mubr.bf16.gmra.mrb[0].mxu0 %v823
        %v859 = vpop.f32.mrb[0].mxu0
        %v860 = vadd.f32 0.0, %v859
        %v861 = vpop.f32.mrb[0].mxu0
        %v862 = vadd.f32 0.0, %v861
        %v863 = vpop.f32.mrb[0].mxu0
        %v864 = vpop.f32.mrb[0].mxu0
        %865 = vdwg.mxu0
        %866 = vst [vmem:[%s190] sm:$0xff] %v860
        %867 = vst [vmem:[%s190 + $0x8] sm:$0xff] %v862
        %s868 = sand.u32 %s91, 1
        %s869 = scalar_lea.sflag [#allocation5], %s868
        %s870 = sand.u32 %s91, 1
        %s871 = smul.addr %s870, 16
        %s872 = scalar_lea.vmem [#allocation8], %s871
        // Predicated region
        $region37: #{tpu_custom_call.1} parent=27 // pred_check
          %p873 = pneg %p101
        $region38: #{tpu_custom_call.1} parent=27 // pred_check_branch
          %875 = sbr.rel (%p873) target = $region40
        $region39: #{tpu_custom_call.1} parent=27 // pred_region
          %s876 = smul.u32 2, %s25
          %s878 = ssub.s32 256, 256
          %879 = vsyncadd %s869, %s878
          %s880 = smul.addr %s24, 2
          %s881 = sadd.s32 %s876, %s880
          %s882 = smul.addr %s881, 128
          %s883 = scalar_lea.hbm %s2, %s882
          %s885 = sshll.u32 %s872, 4
          %s886 = int_to_ptr.vmem [resolvable:$true] %s885
          %888 = dma.vmem_to_hbm [thread:$0]  %s886, 256, %s883, %s869
        $region40: #{tpu_custom_call.1} parent=27 // pred_fallthru
          _
      $region28: #{tpu_custom_call.1} parent=5 // pred_fallthru
        _
      %p889 = scmp.le.s32.totalorder 2, %s15
      // Predicated region
      $region41: #{tpu_custom_call.1} parent=5 // pred_check
        %p890 = pneg %p889
      $region42: #{tpu_custom_call.1} parent=5 // pred_check_branch
        %892 = sbr.rel (%p890) target = $region44
      $region43: #{tpu_custom_call.1} parent=5 // pred_region
        %s893 = ssub.s32 %s15, 2
        // Predicated region
        $region45: #{tpu_custom_call.1} parent=43 // pred_check
          %p894 = pneg %p107
        $region46: #{tpu_custom_call.1} parent=43 // pred_check_branch
          %896 = sbr.rel (%p894) target = $region48
        $region47: #{tpu_custom_call.1} parent=43 // pred_region
          %s897 = sand.u32 %s92, 1
          %s898 = scalar_lea.sflag [#allocation5], %s897
          %s899 = sand.u32 %s92, 1
          %s900 = smul.addr %s899, 16
          %s901 = scalar_lea.vmem [#allocation8], %s900
          %902 = dma.done %s898, 256
        $region48: #{tpu_custom_call.1} parent=43 // pred_fallthru
          _
      $region44: #{tpu_custom_call.1} parent=5 // pred_fallthru
        _
    $region6: #{tpu_custom_call.1} parent=1 // loop_footer
      %s19 = sadd.s32 1, %s15
    $region7: #{tpu_custom_call.1} parent=1 // loop_footer_branch
      %14 = sbr.rel target = $region3
    $region8: #{tpu_custom_call.1} parent=1 // loop_exit
      _
    %903 = vsyncpa [#allocation4], 1
    %s904 = scalar_lea.sflag [#allocation4], 1
    %905 = vsyncpa %s904, 1
    %906 = vsyncpa [#allocation7], 1
    %907 = vsyncpa [#allocation5], 1
    %s908 = scalar_lea.sflag [#allocation5], 1
    %909 = vsyncpa %s908, 1

</llo_original>
